<compile_context>
chip_gen: v6e
topology: v6e:2x2x1
jax: 0.10.0
libtpu: 0.0.40
codegen_flags: <defaults>
</compile_context>

<pallas_src>
import functools

import jax
import jax.numpy as jnp
from jax.experimental import pallas as pl
from jax.experimental.pallas import tpu as pltpu


# ----------------------------------------------------------------------------
# Kernel 1: global average pool (f32 accumulation) + batched FC -> gate (N,C,1)
# ----------------------------------------------------------------------------
def _pool_fc_kernel(x_ref, w1t_ref, b1_ref, w2t_ref, b2_ref,
                    scale_ref, sum_ref, *, inv_hw):
    t = pl.program_id(0)

    @pl.when(t == 0)
    def _():
        sum_ref[...] = jnp.zeros_like(sum_ref)

    # Partial spatial sum with f32 accumulation straight from the native-dtype
    # ref (no full-tile f32 copy of x).
    sum_ref[...] += jnp.sum(x_ref[...], axis=-1, dtype=jnp.float32)

    @pl.when(t == pl.num_programs(0) - 1)
    def _():
        mean = sum_ref[...] * inv_hw                                    # (N, C) f32
        # fc1 (1x1 conv == linear C -> Cs), batched over N, contraction on lanes
        h = jnp.dot(mean, w1t_ref[...].astype(jnp.float32),
                    preferred_element_type=jnp.float32)
        h = jnp.maximum(h + b1_ref[...].astype(jnp.float32), 0.0)       # (N, Cs)
        # fc2 (1x1 conv == linear Cs -> C), batched over N
        z = jnp.dot(h, w2t_ref[...].astype(jnp.float32),
                    preferred_element_type=jnp.float32)
        z = z + b2_ref[...].astype(jnp.float32)                         # (N, C)
        scale_ref[...] = jax.nn.sigmoid(z)[:, :, None].astype(scale_ref.dtype)


# ----------------------------------------------------------------------------
# Kernel 2: streaming broadcast multiply, out = x * scale (native dtype)
# ----------------------------------------------------------------------------
def _apply_kernel(x_ref, scale_ref, o_ref):
    # x_ref: (1, C, T), scale_ref: (1, C, 1) -> broadcast over the lane dim.
    o_ref[...] = x_ref[...] * scale_ref[...]


def _pick_hw_tile(hw, c, itemsize):
    """Largest lane-dense spatial tile that divides HW and keeps blocks small."""
    max_bytes = 1 << 20  # ~1 MiB per block: double-buffered in+out stays tiny vs VMEM
    for t in (2048, 1024, 512, 256, 128):
        if hw % t == 0 and c * t * itemsize <= max_bytes:
            return t
    # HW not a multiple of 128 (e.g. 7*7, 14*14): fall back to the full extent
    # (stores become masked; still correct).
    return hw


def squeeze_excitation(x, w1, b1, w2, b2):
    """x: (N, C, H, W); w1: (Cs, C); b1: (Cs, 1); w2: (C, Cs); b2: (C, 1)."""
    N, C, H, W = x.shape
    Cs = w1.shape[0]
    HW = H * W
    x_flat = x.reshape(N, C, HW)

    T = _pick_hw_tile(HW, C, x.dtype.itemsize)
    n_t = HW // T

    # Row-vector / transposed parameter layouts so the FC contractions run
    # along lanes as batched (N, ...) matmuls.
    w1t = w1.T                    # (C, Cs)
    w2t = w2.T                    # (Cs, C)
    b1row = b1.reshape(1, Cs)
    b2row = b2.reshape(1, C)

    # --- phase 1: pool + FC -> per-(n, c) gate ------------------------------
    scale = pl.pallas_call(
        functools.partial(_pool_fc_kernel, inv_hw=1.0 / HW),
        out_shape=jax.ShapeDtypeStruct((N, C, 1), x.dtype),
        grid_spec=pltpu.PrefetchScalarGridSpec(
            num_scalar_prefetch=0,
            grid=(n_t,),
            in_specs=[
                pl.BlockSpec((N, C, T), lambda t: (0, 0, t)),
                pl.BlockSpec((C, Cs), lambda t: (0, 0)),
                pl.BlockSpec((1, Cs), lambda t: (0, 0)),
                pl.BlockSpec((Cs, C), lambda t: (0, 0)),
                pl.BlockSpec((1, C), lambda t: (0, 0)),
            ],
            out_specs=pl.BlockSpec((N, C, 1), lambda t: (0, 0, 0)),
            scratch_shapes=[pltpu.VMEM((N, C), jnp.float32)],
        ),
        compiler_params=pltpu.CompilerParams(
            dimension_semantics=("arbitrary",)),
    )(x_flat, w1t, b1row, w2t, b2row)

    # --- phase 2: streaming apply, grid over (N, spatial tiles) -------------
    out_flat = pl.pallas_call(
        _apply_kernel,
        out_shape=jax.ShapeDtypeStruct((N, C, HW), x.dtype),
        grid_spec=pltpu.PrefetchScalarGridSpec(
            num_scalar_prefetch=0,
            grid=(N, n_t),
            in_specs=[
                pl.BlockSpec((1, C, T), lambda n, t: (n, 0, t)),
                pl.BlockSpec((1, C, 1), lambda n, t: (n, 0, 0)),
            ],
            out_specs=pl.BlockSpec((1, C, T), lambda n, t: (n, 0, t)),
        ),
        compiler_params=pltpu.CompilerParams(
            dimension_semantics=("parallel", "parallel")),
    )(x_flat, scale)

    return out_flat.reshape(N, C, H, W)


def se_reference(x, w1, b1, w2, b2):
    """Pure-JAX reference matching the PyTorch forward."""
    mean = jnp.mean(x.astype(jnp.float32), axis=(2, 3))                  # (N, C)
    h = jnp.maximum(mean @ w1.T + b1[:, 0], 0.0)                         # (N, Cs)
    s = jax.nn.sigmoid(h @ w2.T + b2[:, 0])                              # (N, C)
    return x * s[:, :, None, None].astype(x.dtype)


if __name__ == "__main__":
    key = jax.random.PRNGKey(0)
    N, C, H, W = 2, 4, 16, 16
    squeeze_factor = 4
    Cs = C // squeeze_factor

    k_x, k_w1, k_b1, k_w2, k_b2 = jax.random.split(key, 5)
    x = jax.random.normal(k_x, (N, C, H, W), dtype=jnp.float32)

    # Deterministic parameter init (1x1 conv weights == dense matrices)
    w1 = jax.random.normal(k_w1, (Cs, C), dtype=jnp.float32) * 0.5   # fc1.weight
    b1 = jax.random.normal(k_b1, (Cs, 1), dtype=jnp.float32) * 0.1   # fc1.bias
    w2 = jax.random.normal(k_w2, (C, Cs), dtype=jnp.float32) * 0.5   # fc2.weight
    b2 = jax.random.normal(k_b2, (C, 1), dtype=jnp.float32) * 0.1    # fc2.bias

    out = squeeze_excitation(x, w1, b1, w2, b2)
    out = jax.block_until_ready(out)

    ref = se_reference(x, w1, b1, w2, b2)
    assert jnp.allclose(out, ref, atol=1e-5, rtol=1e-5), "mismatch vs reference"

    print("KERNEL_OK")
</pallas_src>

<mosaic_0001>
module attributes {stable_mosaic.version = 11 : i64} {
  func.func @_pool_fc_kernel(%arg0: i32, %arg1: memref<2x4x256xf32, #tpu.memory_space<vmem>>, %arg2: memref<4x1xf32, #tpu.memory_space<vmem>>, %arg3: memref<1x1xf32, #tpu.memory_space<vmem>>, %arg4: memref<1x4xf32, #tpu.memory_space<vmem>>, %arg5: memref<1x4xf32, #tpu.memory_space<vmem>>, %arg6: memref<2x4x1xf32, #tpu.memory_space<vmem>>, %arg7: memref<2x4xf32, #tpu.memory_space<vmem>>) attributes {dimension_semantics = [#tpu.dimension_semantics<arbitrary>], iteration_bounds = array<i64: 1>, scalar_prefetch = 0 : i64, scratch_operands = 1 : i64, tpu.core_type = #tpu.core_type<tc>, window_params = [{transform_indices = @transform_0, window_bounds = array<i64: 2, 4, 256>}, {pipeline_mode = #tpu.pipeline_mode<synchronous>, transform_indices = @transform_1, window_bounds = array<i64: 4, 1>}, {pipeline_mode = #tpu.pipeline_mode<synchronous>, transform_indices = @transform_2, window_bounds = array<i64: 1, 1>}, {pipeline_mode = #tpu.pipeline_mode<synchronous>, transform_indices = @transform_3, window_bounds = array<i64: 1, 4>}, {pipeline_mode = #tpu.pipeline_mode<synchronous>, transform_indices = @transform_4, window_bounds = array<i64: 1, 4>}, {pipeline_mode = #tpu.pipeline_mode<synchronous>, transform_indices = @transform_5, window_bounds = array<i64: 2, 4, 1>}]} {
    %c0_i32 = arith.constant 0 : i32
    %0 = arith.cmpi eq, %arg0, %c0_i32 : i32
    %1 = arith.extui %0 : i1 to i32
    %c0_i32_0 = arith.constant 0 : i32
    %2 = arith.cmpi ne, %1, %c0_i32_0 : i32
    scf.if %2 {
      %cst_9 = arith.constant 0.000000e+00 : f32
      %11 = vector.broadcast %cst_9 : f32 to vector<2x4xf32>
      %c0_10 = arith.constant 0 : index
      %c0_11 = arith.constant 0 : index
      %12 = vector.load %arg7[%c0_10, %c0_11] : memref<2x4xf32, #tpu.memory_space<vmem>>, vector<2x4xf32>
      tpu.vector_store %arg7[%c0_10, %c0_11], %11 {strides = array<i32>} : memref<2x4xf32, #tpu.memory_space<vmem>>, vector<2x4xf32>,
    } else {
    }
    %c0 = arith.constant 0 : index
    %c0_1 = arith.constant 0 : index
    %3 = vector.load %arg7[%c0, %c0_1] : memref<2x4xf32, #tpu.memory_space<vmem>>, vector<2x4xf32>
    %c0_2 = arith.constant 0 : index
    %c0_3 = arith.constant 0 : index
    %c0_4 = arith.constant 0 : index
    %4 = vector.load %arg1[%c0_2, %c0_3, %c0_4] : memref<2x4x256xf32, #tpu.memory_space<vmem>>, vector<2x4x256xf32>
    %cst = arith.constant dense<0.000000e+00> : vector<2x4xf32>
    %5 = vector.multi_reduction <add>, %4, %cst [2] : vector<2x4x256xf32> to vector<2x4xf32>
    %6 = arith.addf %3, %5 : vector<2x4xf32>
    %c0_5 = arith.constant 0 : index
    %c0_6 = arith.constant 0 : index
    %7 = vector.load %arg7[%c0_5, %c0_6] : memref<2x4xf32, #tpu.memory_space<vmem>>, vector<2x4xf32>
    tpu.vector_store %arg7[%c0_5, %c0_6], %6 {strides = array<i32>} : memref<2x4xf32, #tpu.memory_space<vmem>>, vector<2x4xf32>,
    %c0_i32_7 = arith.constant 0 : i32
    %8 = arith.cmpi eq, %arg0, %c0_i32_7 : i32
    %9 = arith.extui %8 : i1 to i32
    %c0_i32_8 = arith.constant 0 : i32
    %10 = arith.cmpi ne, %9, %c0_i32_8 : i32
    scf.if %10 {
      %c0_9 = arith.constant 0 : index
      %c0_10 = arith.constant 0 : index
      %11 = vector.load %arg7[%c0_9, %c0_10] : memref<2x4xf32, #tpu.memory_space<vmem>>, vector<2x4xf32>
      %cst_11 = arith.constant 3.906250e-03 : f32
      %12 = vector.broadcast %cst_11 : f32 to vector<2x4xf32>
      %13 = arith.mulf %11, %12 : vector<2x4xf32>
      %c0_12 = arith.constant 0 : index
      %c0_13 = arith.constant 0 : index
      %14 = vector.load %arg2[%c0_12, %c0_13] : memref<4x1xf32, #tpu.memory_space<vmem>>, vector<4x1xf32>
      %cst_14 = arith.constant dense<0.000000e+00> : vector<2x1xf32>
      %15 = tpu.matmul %13, %14, %cst_14 {dimension_numbers = #tpu.dot_dimension_numbers<[1], [0], [0], [1], [0, 0, 1, 1], [], []>} : vector<2x4xf32>, vector<4x1xf32>, vector<2x1xf32> -> vector<2x1xf32>
      %c0_15 = arith.constant 0 : index
      %c0_16 = arith.constant 0 : index
      %16 = vector.load %arg3[%c0_15, %c0_16] : memref<1x1xf32, #tpu.memory_space<vmem>>, vector<1x1xf32>
      %17 = vector.broadcast %16 : vector<1x1xf32> to vector<2x1xf32>
      %18 = arith.addf %15, %17 : vector<2x1xf32>
      %cst_17 = arith.constant 0.000000e+00 : f32
      %19 = vector.broadcast %cst_17 : f32 to vector<2x1xf32>
      %20 = arith.maximumf %18, %19 : vector<2x1xf32>
      %c0_18 = arith.constant 0 : index
      %c0_19 = arith.constant 0 : index
      %21 = vector.load %arg4[%c0_18, %c0_19] : memref<1x4xf32, #tpu.memory_space<vmem>>, vector<1x4xf32>
      %cst_20 = arith.constant dense<0.000000e+00> : vector<2x4xf32>
      %22 = tpu.matmul %20, %21, %cst_20 {dimension_numbers = #tpu.dot_dimension_numbers<[1], [0], [0], [1], [0, 0, 1, 1], [], []>} : vector<2x1xf32>, vector<1x4xf32>, vector<2x4xf32> -> vector<2x4xf32>
      %c0_21 = arith.constant 0 : index
      %c0_22 = arith.constant 0 : index
      %23 = vector.load %arg5[%c0_21, %c0_22] : memref<1x4xf32, #tpu.memory_space<vmem>>, vector<1x4xf32>
      %24 = vector.broadcast %23 : vector<1x4xf32> to vector<2x4xf32>
      %25 = arith.addf %22, %24 : vector<2x4xf32>
      %26 = arith.negf %25 : vector<2x4xf32>
      %27 = math.exp %26 : vector<2x4xf32>
      %cst_23 = arith.constant 1.000000e+00 : f32
      %28 = vector.broadcast %cst_23 : f32 to vector<2x4xf32>
      %29 = arith.addf %28, %27 : vector<2x4xf32>
      %30 = arith.divf %28, %29 : vector<2x4xf32>
      %31 = vector.shape_cast %30 : vector<2x4xf32> to vector<2x4x1xf32>
      %c0_24 = arith.constant 0 : index
      %c0_25 = arith.constant 0 : index
      %c0_26 = arith.constant 0 : index
      %32 = vector.load %arg6[%c0_24, %c0_25, %c0_26] : memref<2x4x1xf32, #tpu.memory_space<vmem>>, vector<2x4x1xf32>
      tpu.vector_store %arg6[%c0_24, %c0_25, %c0_26], %31 {strides = array<i32>} : memref<2x4x1xf32, #tpu.memory_space<vmem>>, vector<2x4x1xf32>,
    } else {
    }
    return
  }
  func.func @transform_0(%arg0: i32) -> (i32, i32, i32) {
    %c0_i32 = arith.constant 0 : i32
    %c0_i32_0 = arith.constant 0 : i32
    %c0_i32_1 = arith.constant 0 : i32
    return %c0_i32, %c0_i32_0, %arg0 : i32, i32, i32
  }
  func.func @transform_1(%arg0: i32) -> (i32, i32) {
    %c0_i32 = arith.constant 0 : i32
    %c0_i32_0 = arith.constant 0 : i32
    %c0_i32_1 = arith.constant 0 : i32
    return %c0_i32, %c0_i32_0 : i32, i32
  }
  func.func @transform_2(%arg0: i32) -> (i32, i32) {
    %c0_i32 = arith.constant 0 : i32
    %c0_i32_0 = arith.constant 0 : i32
    %c0_i32_1 = arith.constant 0 : i32
    return %c0_i32, %c0_i32_0 : i32, i32
  }
  func.func @transform_3(%arg0: i32) -> (i32, i32) {
    %c0_i32 = arith.constant 0 : i32
    %c0_i32_0 = arith.constant 0 : i32
    %c0_i32_1 = arith.constant 0 : i32
    return %c0_i32, %c0_i32_0 : i32, i32
  }
  func.func @transform_4(%arg0: i32) -> (i32, i32) {
    %c0_i32 = arith.constant 0 : i32
    %c0_i32_0 = arith.constant 0 : i32
    %c0_i32_1 = arith.constant 0 : i32
    return %c0_i32, %c0_i32_0 : i32, i32
  }
  func.func @transform_5(%arg0: i32) -> (i32, i32, i32) {
    %c0_i32 = arith.constant 0 : i32
    %c0_i32_0 = arith.constant 0 : i32
    %c0_i32_1 = arith.constant 0 : i32
    %c0_i32_2 = arith.constant 0 : i32
    return %c0_i32, %c0_i32_0, %c0_i32_1 : i32, i32, i32
  }
}

</mosaic_0001>

<llo_original>
// kernel: tpu_custom_call.1
$region0: #{tpu_custom_call.1}
  #allocation0 [shape = 'u32[]', space=smem, size = 0x4, offset = 0x4, fixed_abs, tag = 'smem constant byte address 0x4 - core index']
  #allocation1 [shape = 'u32[144,128]{1,0:T(1,128)}', space=vmem, size = 0x12000, scoped, tag = 'internal scratch']
  #allocation2 [shape = 'f32[2,4]{1,0:T(2,128)}', space=vmem, size = 0x400, scoped, tag = 'scratch operand']
  #allocation3 [shape = 'f32[1,1]{1,0:T(1,128)S(1)}', space=vmem, size = 0x200, scoped, tag = 'scoped memory for tpu_custom_call.1']
  %s0 = inlined_call_operand.hbm [shape: f32[2,4,256], index: 0, kind: input, shape index: {}]
  %s1 = inlined_call_operand.vmem [shape: f32[4,1], index: 1, kind: input, shape index: {}]
  %s2 = inlined_call_operand.<no memory space> [shape: f32[1,1], index: 2, kind: input, shape index: {}]
  %s3 = inlined_call_operand.vmem [shape: f32[1,4], index: 3, kind: input, shape index: {}]
  %s4 = inlined_call_operand.vmem [shape: f32[1,4], index: 4, kind: input, shape index: {}]
  %s5 = inlined_call_operand.vmem [shape: f32[2,4,1], index: 5, kind: output, shape index: {}]
  %s6 = sld [smem:[#allocation0]]
  $region42: #{tpu_custom_call.1} parent=0
    _
  %s8 = ssub.s32 1, %s6
  %s9 = scalar_select 0, %s8, %s6
  %v10 = vstv %s2
  %11 = vst [vmem:[#allocation3] sm:$0x1] %v10
  $region1: #{tpu_custom_call.1} parent=0
    #allocation4 [shape = 'u8[8192]{0}', space=vmem, size = 0x2000, scoped, tag = 'input window, operand 0, single buffered']
    #allocation5 [shape = 's32[1]{0}', space=sflag, size = 0x4, scoped, tag = 'scoped memory for tpu_custom_call.1']
    %12 = vsyncpa [#allocation5], 0
    // Predicated region
    $region2: #{tpu_custom_call.1} parent=1 // pred_check
      _
    $region3: #{tpu_custom_call.1} parent=1 // pred_check_branch
      %14 = sbr.rel (0) target = $region5
    $region4: #{tpu_custom_call.1} parent=1 // pred_region
      %s16 = ssub.s32 256, 256
      %17 = vsyncadd [#allocation5], %s16
      %s18 = sshll.u32 [#allocation4], 4
      %s19 = int_to_ptr.vmem [resolvable:$true] %s18
      %24 = dma.hbm_to_vmem [thread:$0]  %s0, 256, %s19, [#allocation5], 128, 128, 8
    $region5: #{tpu_custom_call.1} parent=1 // pred_fallthru
      _
    // Predicated region
    $region6: #{tpu_custom_call.1} parent=1 // pred_check
      _
    $region7: #{tpu_custom_call.1} parent=1 // pred_check_branch
      %26 = sbr.rel (0) target = $region9
    $region8: #{tpu_custom_call.1} parent=1 // pred_region
      _
    $region9: #{tpu_custom_call.1} parent=1 // pred_fallthru
      _
    // Predicated region
    $region10: #{tpu_custom_call.1} parent=1 // pred_check
      _
    $region11: #{tpu_custom_call.1} parent=1 // pred_check_branch
      %28 = sbr.rel (0) target = $region13
    $region12: #{tpu_custom_call.1} parent=1 // pred_region
      _
    $region13: #{tpu_custom_call.1} parent=1 // pred_fallthru
      _
    // Predicated region
    $region14: #{tpu_custom_call.1} parent=1 // pred_check
      _
    $region15: #{tpu_custom_call.1} parent=1 // pred_check_branch
      %30 = sbr.rel (0) target = $region17
    $region16: #{tpu_custom_call.1} parent=1 // pred_region
      _
    $region17: #{tpu_custom_call.1} parent=1 // pred_fallthru
      _
    // Predicated region
    $region18: #{tpu_custom_call.1} parent=1 // pred_check
      _
    $region19: #{tpu_custom_call.1} parent=1 // pred_check_branch
      %32 = sbr.rel (0) target = $region21
    $region20: #{tpu_custom_call.1} parent=1 // pred_region
      _
    $region21: #{tpu_custom_call.1} parent=1 // pred_fallthru
      _
    // Predicated region
    $region22: #{tpu_custom_call.1} parent=1 // pred_check
      _
    $region23: #{tpu_custom_call.1} parent=1 // pred_check_branch
      %34 = sbr.rel (0) target = $region25
    $region24: #{tpu_custom_call.1} parent=1 // pred_region
      %35 = dma.done [#allocation5], 256
    $region25: #{tpu_custom_call.1} parent=1 // pred_fallthru
      _
    %p36 = scmp.eq.s32.totalorder 0, 0
    // Predicated region
    $region26: #{tpu_custom_call.1} parent=1 // pred_check
      %p37 = pneg %p36
    $region27: #{tpu_custom_call.1} parent=1 // pred_check_branch
      %39 = sbr.rel (%p37) target = $region29
    $region28: #{tpu_custom_call.1} parent=1 // pred_region
      %vm40 = vcmask 25600
      %41 = vst.msk [vmem:[#allocation2] sm:$0x3] %vm40, 0.0
    $region29: #{tpu_custom_call.1} parent=1 // pred_fallthru
      _
    %v42 = vld [vmem:[#allocation2] sm:$0x3]
    %v43 = vld [vmem:[#allocation4] sm:$0xff]
    %v44 = vld [vmem:[#allocation4 + $0x8] sm:$0xff]
    %v47 = vcombine.high %v43, %v43
    %v48 = vcombine.high %v44, %v44
    %vm51 = vcmask 1043456
    %v52 = vsel %vm51, %v43, 0.0
    %v53 = vsel %vm51, %v47, 0.0
    %v54 = vadd.f32 %v52, %v53
    %55 = vadd.xlane.f32.xlu0 %v54
    %v56 = vpop.xlane.xlu0 %55
    %v57 = vsel %vm51, %v44, 0.0
    %v58 = vsel %vm51, %v48, 0.0
    %v59 = vadd.f32 %v57, %v58
    %60 = vadd.xlane.f32.xlu0 %v59
    %v61 = vpop.xlane.xlu0 %60
    %v64 = vlaneseq
    %v65 = vand.u32 %v64, 127
    %v66 = vlaneseq
    %v67 = vshrl.u32 %v66, 7
    %v68 = vsub.s32 %v65, %v67
    %v69 = vrot.slane %v56, %v68
    %v70 = vlaneseq
    %v71 = vshrl.u32 %v70, 7
    %v72 = vsub.s32 %v65, %v71
    %v73 = vrot.slane %v61, %v72
    %vm74 = vcmask 1041409
    %v75 = vsel %vm74, %v73, %v69
    %v77 = vadd.f32 %v42, %v75
    %vm78 = vcmask 25600
    %79 = vst.msk [vmem:[#allocation2] sm:$0x3] %vm78, %v77
    // Predicated region
    $region30: #{tpu_custom_call.1} parent=1 // pred_check
      %p80 = pneg %p36
    $region31: #{tpu_custom_call.1} parent=1 // pred_check_branch
      %82 = sbr.rel (%p80) target = $region33
    $region32: #{tpu_custom_call.1} parent=1 // pred_region
      %v83 = vld [vmem:[#allocation2] sm:$0x3]
      %v84 = vmul.f32 %v83, 0.00390625
      %v85 = vld [vmem:[%s1] sm:$0xf]
      %v86 = vld [vmem:[#allocation3] sm:$0x1]
      %v88 = vlaneseq
      %v89 = vshrl.u32 %v88, 7
      %v90 = vsub.s32 0, %v89
      %v91 = vrot.slane %v86, %v90
      %vm93 = vcmask 31744
      %v95 = vsel %vm93, %v84, 0
      %v98 = vsel %vm51, %v85, 0
      %100 = vmatprep.subr.mxu0 0.0
      %101 = vmatpush1.msra.mxu0 0.0
      %102 = vmatprep.subr.mxu0 0.0
      %103 = vmatpush1.msra.mxu0 0.0
      %104 = vmatprep.subr.mxu0 0.0
      %105 = vmatpush1.msra.mxu0 0.0
      %106 = vmatprep.subr.mxu0 0.0
      %107 = vmatpush1.msra.mxu0 0.0
      %108 = vmatprep.subr.mxu0 0.0
      %109 = vmatpush1.msra.mxu0 0.0
      %110 = vmatprep.subr.mxu0 0.0
      %111 = vmatpush1.msra.mxu0 0.0
      %112 = vmatprep.subr.mxu0 0.0
      %113 = vmatpush1.msra.mxu0 0.0
      %114 = vmatprep.subr.mxu0 0.0
      %115 = vmatpush1.msra.mxu0 0.0
      %116 = vmatprep.subr.mxu0 0.0
      %117 = vmatpush1.msra.mxu0 0.0
      %118 = vmatprep.subr.mxu0 0.0
      %119 = vmatpush1.msra.mxu0 0.0
      %120 = vmatprep.subr.mxu0 0.0
      %121 = vmatpush1.msra.mxu0 0.0
      %122 = vmatprep.subr.mxu0 0.0
      %123 = vmatpush1.msra.mxu0 0.0
      %124 = vmatprep.subr.mxu0 0.0
      %125 = vmatpush1.msra.mxu0 0.0
      %126 = vmatprep.subr.mxu0 0.0
      %127 = vmatpush1.msra.mxu0 0.0
      %128 = vmatprep.subr.mxu0 0.0
      %129 = vmatpush1.msra.mxu0 0.0
      %130 = vmatprep.subr.mxu0 0.0
      %131 = vmatpush1.msra.mxu0 %v98
      %132 = vmatprep.subr.mxu0 0.0
      %133 = vmatpush2.msra.mxu0 0.0
      %134 = vmatprep.subr.mxu0 0.0
      %135 = vmatpush2.msra.mxu0 0.0
      %136 = vmatprep.subr.mxu0 0.0
      %137 = vmatpush2.msra.mxu0 0.0
      %138 = vmatprep.subr.mxu0 0.0
      %139 = vmatpush2.msra.mxu0 0.0
      %140 = vmatprep.subr.mxu0 0.0
      %141 = vmatpush2.msra.mxu0 0.0
      %142 = vmatprep.subr.mxu0 0.0
      %143 = vmatpush2.msra.mxu0 0.0
      %144 = vmatprep.subr.mxu0 0.0
      %145 = vmatpush2.msra.mxu0 0.0
      %146 = vmatprep.subr.mxu0 0.0
      %147 = vmatpush2.msra.mxu0 0.0
      %148 = vmatprep.subr.mxu0 0.0
      %149 = vmatpush2.msra.mxu0 0.0
      %150 = vmatprep.subr.mxu0 0.0
      %151 = vmatpush2.msra.mxu0 0.0
      %152 = vmatprep.subr.mxu0 0.0
      %153 = vmatpush2.msra.mxu0 0.0
      %154 = vmatprep.subr.mxu0 0.0
      %155 = vmatpush2.msra.mxu0 0.0
      %156 = vmatprep.subr.mxu0 0.0
      %157 = vmatpush2.msra.mxu0 0.0
      %158 = vmatprep.subr.mxu0 0.0
      %159 = vmatpush2.msra.mxu0 0.0
      %160 = vmatprep.subr.mxu0 0.0
      %161 = vmatpush2.msra.mxu0 0.0
      %162 = vmatprep.subr.mxu0 0.0
      %163 = vmatpush2.msra.mxu0 0.0
      %164 = vmatprep.mubr.f32.mxu0 0.0
      %165 = vmatmul.mubr.f32.gmra.mxu0 %v95
      %v166 = vpop.f32.mrf.mxu0
      %v167 = vadd.f32 %v91, %v166
      %v168 = vpop.f32.mrf.mxu0
      %169 = vdwg.mxu0
      %v170 = vmax.f32 %v167, 0.0
      %v171 = vld [vmem:[%s3] sm:$0x1]
      %v172 = vld [vmem:[%s4] sm:$0x1]
      %v174 = vlaneseq
      %v175 = vshrl.u32 %v174, 7
      %v176 = vsub.s32 0, %v175
      %v177 = vrot.slane %v172, %v176
      %vm179 = vcmask 7168
      %v181 = vsel %vm179, %v170, 0
      %vm183 = vcmask 1040384
      %v185 = vsel %vm183, %v171, 0
      %187 = vmatprep.subr.mxu0 0.0
      %188 = vmatpush1.msra.mxu0 0.0
      %189 = vmatprep.subr.mxu0 0.0
      %190 = vmatpush1.msra.mxu0 0.0
      %191 = vmatprep.subr.mxu0 0.0
      %192 = vmatpush1.msra.mxu0 0.0
      %193 = vmatprep.subr.mxu0 0.0
      %194 = vmatpush1.msra.mxu0 0.0
      %195 = vmatprep.subr.mxu0 0.0
      %196 = vmatpush1.msra.mxu0 0.0
      %197 = vmatprep.subr.mxu0 0.0
      %198 = vmatpush1.msra.mxu0 0.0
      %199 = vmatprep.subr.mxu0 0.0
      %200 = vmatpush1.msra.mxu0 0.0
      %201 = vmatprep.subr.mxu0 0.0
      %202 = vmatpush1.msra.mxu0 0.0
      %203 = vmatprep.subr.mxu0 0.0
      %204 = vmatpush1.msra.mxu0 0.0
      %205 = vmatprep.subr.mxu0 0.0
      %206 = vmatpush1.msra.mxu0 0.0
      %207 = vmatprep.subr.mxu0 0.0
      %208 = vmatpush1.msra.mxu0 0.0
      %209 = vmatprep.subr.mxu0 0.0
      %210 = vmatpush1.msra.mxu0 0.0
      %211 = vmatprep.subr.mxu0 0.0
      %212 = vmatpush1.msra.mxu0 0.0
      %213 = vmatprep.subr.mxu0 0.0
      %214 = vmatpush1.msra.mxu0 0.0
      %215 = vmatprep.subr.mxu0 0.0
      %216 = vmatpush1.msra.mxu0 0.0
      %217 = vmatprep.subr.mxu0 0.0
      %218 = vmatpush1.msra.mxu0 %v185
      %219 = vmatprep.subr.mxu0 0.0
      %220 = vmatpush2.msra.mxu0 0.0
      %221 = vmatprep.subr.mxu0 0.0
      %222 = vmatpush2.msra.mxu0 0.0
      %223 = vmatprep.subr.mxu0 0.0
      %224 = vmatpush2.msra.mxu0 0.0
      %225 = vmatprep.subr.mxu0 0.0
      %226 = vmatpush2.msra.mxu0 0.0
      %227 = vmatprep.subr.mxu0 0.0
      %228 = vmatpush2.msra.mxu0 0.0
      %229 = vmatprep.subr.mxu0 0.0
      %230 = vmatpush2.msra.mxu0 0.0
      %231 = vmatprep.subr.mxu0 0.0
      %232 = vmatpush2.msra.mxu0 0.0
      %233 = vmatprep.subr.mxu0 0.0
      %234 = vmatpush2.msra.mxu0 0.0
      %235 = vmatprep.subr.mxu0 0.0
      %236 = vmatpush2.msra.mxu0 0.0
      %237 = vmatprep.subr.mxu0 0.0
      %238 = vmatpush2.msra.mxu0 0.0
      %239 = vmatprep.subr.mxu0 0.0
      %240 = vmatpush2.msra.mxu0 0.0
      %241 = vmatprep.subr.mxu0 0.0
      %242 = vmatpush2.msra.mxu0 0.0
      %243 = vmatprep.subr.mxu0 0.0
      %244 = vmatpush2.msra.mxu0 0.0
      %245 = vmatprep.subr.mxu0 0.0
      %246 = vmatpush2.msra.mxu0 0.0
      %247 = vmatprep.subr.mxu0 0.0
      %248 = vmatpush2.msra.mxu0 0.0
      %249 = vmatprep.subr.mxu0 0.0
      %250 = vmatpush2.msra.mxu0 0.0
      %251 = vmatprep.mubr.f32.mxu0 0.0
      %252 = vmatmul.mubr.f32.gmra.mxu0 %v181
      %v253 = vpop.f32.mrf.mxu0
      %v254 = vadd.f32 %v177, %v253
      %v255 = vpop.f32.mrf.mxu0
      %256 = vdwg.mxu0
      %v257 = vxor.u32 %v254, 2147483648
      %v258 = vmul.f32 %v257, 1.442695
      %v259 = vpow.pop %v258
      %v260 = vadd.f32 %v259, 1.0
      %v261 = vrcp.pop %v260
      %v262 = vmul.f32 1.0, %v261
      %v263 = vlaneseq
      %v264 = vshrl.u32 %v263, 7
      %v265 = vsub.s32 0, %v264
      %v266 = vrot.slane %v262, %v265
      %268 = vbcast.lane.b32.xlu0 %v266, 256
      %v269 = vpop.permute.xlu0 %268
      %v270 = vlaneseq
      %v271 = vshrl.u32 %v270, 7
      %v272 = vsub.s32 1, %v271
      %v273 = vrot.slane %v262, %v272
      %275 = vbcast.lane.b32.xlu0 %v273, 256
      %v276 = vpop.permute.xlu0 %275
      %vm277 = vcmask 3072
      %278 = vst.msk [vmem:[%s5] sm:$0xf] %vm277, %v269
      %279 = vst.msk [vmem:[%s5 + $0x4] sm:$0xf] %vm277, %v276
    $region33: #{tpu_custom_call.1} parent=1 // pred_fallthru
      _
    // Predicated region
    $region34: #{tpu_custom_call.1} parent=1 // pred_check
      _
    $region35: #{tpu_custom_call.1} parent=1 // pred_check_branch
      %281 = sbr.rel (0) target = $region37
    $region36: #{tpu_custom_call.1} parent=1 // pred_region
      _
    $region37: #{tpu_custom_call.1} parent=1 // pred_fallthru
      _
    // Predicated region
    $region38: #{tpu_custom_call.1} parent=1 // pred_check
      _
    $region39: #{tpu_custom_call.1} parent=1 // pred_check_branch
      %283 = sbr.rel (0) target = $region41
    $region40: #{tpu_custom_call.1} parent=1 // pred_region
      _
    $region41: #{tpu_custom_call.1} parent=1 // pred_fallthru
      _
    %284 = vsyncpa [#allocation5], 1

</llo_original>
